<compile_context>
chip_gen: v7x
topology: tpu7x:2x2x1
jax: 0.10.0
libtpu: 0.0.40
codegen_flags: <defaults>
</compile_context>

<pallas_src>
import numpy as np
import jax
import jax.numpy as jnp
from jax.experimental import pallas as pl
from jax.experimental.pallas import tpu as pltpu

# ----------------------- module "constructor" (deterministic) -----------------
M = 4          # messenger grid size -> m*m = 16 symbolic models
C = 4          # feature channels on the last axis (needs >= 3: features 0 and 2)

# Stand-in library of PySR-style elementwise expressions of two symbols.
# (name, fn, #transcendentals per call)
SYMBOLIC_FUNCS = [
    ("x0 + 0.5*x2",       lambda x0, x2: x0 + 0.5 * x2,              0),
    ("x0 * x2",           lambda x0, x2: x0 * x2,                    0),
    ("tanh(x0) - x2",     lambda x0, x2: jnp.tanh(x0) - x2,          1),
    ("exp(-x0*x0) + x2",  lambda x0, x2: jnp.exp(-x0 * x0) + x2,     1),
    ("0.7*max(x0, x2)",   lambda x0, x2: 0.7 * jnp.maximum(x0, x2),  0),
    ("x0 - x2*x2",        lambda x0, x2: x0 - x2 * x2,               0),
]

# Deterministic stand-in for the per-model expression choice.
_rng = np.random.default_rng(0)
F_IDX = [int(_rng.integers(len(SYMBOLIC_FUNCS))) for _ in range(M * M)]

# For each diagonal slot a, the surviving model is i = a*M + (M-1)
# (later i's overwrite earlier ones at the same (a, a) target).
SURVIVING_FUNC_PER_DIAG = [SYMBOLIC_FUNCS[F_IDX[a * M + (M - 1)]][1] for a in range(M)]
N_TRANSC_PER_ROW = sum(SYMBOLIC_FUNCS[F_IDX[a * M + (M - 1)]][2] for a in range(M))

FOLD = 8           # batch rows folded into the lane axis (8*16 = 128 lanes)
TBO_TARGET = 1024  # sublane rows per grid step -> 8192 batch rows / step


# ----------------------------- Pallas kernel ----------------------------------
def make_messenger_kernel(m, diag_funcs):
    g = m * m            # values per batch row for BOTH input (packed) and output
    w = FOLD * g         # lane width of both blocks (128 for m=4)

    def kernel(x_ref, o_ref):
        # x_ref: (TBo, w)  packed diag input: per 16-lane group, slot a holds
        #        [x0_a, x2_a, 0, 0] at lanes [a*m, a*m+3].
        # o_ref: (TBo, w)  flattened (m, m) output grid per 16-lane group.
        x = x_ref[...].astype(jnp.float32)

        # Tile-aligned self-concat; static 128-wide windows of it give circular
        # lane shifts (== jnp.roll) without any unaligned concatenation.
        xx = jnp.concatenate([x, x], axis=1)              # (TBo, 2w)

        def rolled(s):
            s = s % w
            if s == 0:
                return x
            o = w - s
            return xx[:, o:o + w]                         # rolled[j] = x[(j - s) % w]

        lane = jax.lax.broadcasted_iota(jnp.int32, (x.shape[0], w), 1)
        q = lane % g                                      # position inside a row's group
        out = jnp.zeros_like(x)

        for a in range(m):                                # static unroll: m live models
            # Align operands of slot a with the diagonal output lane a*(m+1).
            x0 = rolled(a)                                # x0_a sits at in-lane a*m
            x2 = rolled(a - 1)                            # x2_a sits at in-lane a*m + 1
            y = diag_funcs[a](x0, x2)                     # full-width VPU / EUP
            out = jnp.where(q == a * (m + 1), y, out)     # one-hot diagonal placement

        o_ref[...] = out.astype(o_ref.dtype)              # single dense 128-lane store

    return kernel


@jax.jit
def symbolic_messenger_forward(m_in):
    """m_in: (*lead, m, m, C) float -> (*lead, m, m, 1) float32."""
    *lead, ma, mb, c = m_in.shape
    assert ma == M and mb == M and c >= 3
    m = M
    g = m * m
    w = FOLD * g
    B = int(np.prod(lead)) if lead else 1

    x = m_in.reshape(B, m, m, c)
    idx = jnp.arange(m)
    # Diagonal-only gather of the two used features (producer-side; fuses in XLA).
    x0 = x[:, idx, idx, 0]                                # (B, m)
    x2 = x[:, idx, idx, 2]                                # (B, m)
    pad = jnp.zeros((B, m, m - 2), dtype=m_in.dtype)
    xin = jnp.concatenate([x0[..., None], x2[..., None], pad], axis=-1)  # (B, m, m)
    xin = xin.reshape(B, g)                               # packed 16 values / row

    # ---- tiling: large batch tiles, padded to a whole number of tiles --------
    n_rows = -(-B // FOLD)                                # sublane rows needed
    tbo = min(TBO_TARGET, max(8, -(-n_rows // 4)))        # >=4 grid steps when batch allows
    tbo = -(-tbo // 8) * 8                                # sublane multiple
    n_steps = -(-n_rows // tbo)
    n_rows_pad = n_steps * tbo
    Bpad = n_rows_pad * FOLD
    if Bpad != B:
        xin = jnp.concatenate(
            [xin, jnp.zeros((Bpad - B, g), dtype=xin.dtype)], axis=0)
    x2d = xin.reshape(n_rows_pad, w)                      # free contiguous reshape

    kernel = make_messenger_kernel(m, SURVIVING_FUNC_PER_DIAG)
    in_bytes = n_rows_pad * w * x2d.dtype.itemsize
    out_bytes = n_rows_pad * w * 4
    cost = pl.CostEstimate(
        flops=int(Bpad) * m * 8,
        transcendentals=int(Bpad) * int(N_TRANSC_PER_ROW),
        bytes_accessed=int(in_bytes + out_bytes),
    )

    out2d = pl.pallas_call(
        kernel,
        out_shape=jax.ShapeDtypeStruct((n_rows_pad, w), jnp.float32),
        grid_spec=pltpu.PrefetchScalarGridSpec(
            num_scalar_prefetch=0,
            grid=(n_steps,),
            in_specs=[pl.BlockSpec((tbo, w), lambda i: (i, 0))],
            out_specs=pl.BlockSpec((tbo, w), lambda i: (i, 0)),
        ),
        compiler_params=pltpu.CompilerParams(
            dimension_semantics=("parallel",),            # shards across v7x's 2 TCs
            vmem_limit_bytes=32 * 1024 * 1024,            # explicit headroom (v5e default is 16 MiB)
        ),
        cost_estimate=cost,
    )(x2d)

    out = out2d.reshape(Bpad, g)[:B].reshape(*lead, m, m, 1)
    return out


# ------------------------- plain-JAX reference (check) ------------------------
def ref_forward(m_in):
    """Faithful port of SymbolicMessenger.forward (evaluates all m*m models,
    sequential scatter with overwrites -- including the (i//m, i//m) indexing)."""
    m = M
    m_out = jnp.zeros((*m_in.shape[:-1], 1), jnp.float32)
    for i in range(m * m):
        x = m_in[..., i // m, int(i / m), :]              # (..., C) at slot (i//m, i//m)
        x0 = x[..., 0].astype(jnp.float32)
        x2 = x[..., 2].astype(jnp.float32)
        out_i = SYMBOLIC_FUNCS[F_IDX[i]][1](x0, x2)       # (...,)
        m_out = m_out.at[..., i // m, int(i / m), 0].set(out_i)
    return m_out


# ----------------------------------- main --------------------------------------
if __name__ == "__main__":
    key = jax.random.PRNGKey(0)
    lead = (2, 9)                     # 18 batch rows -> exercises the tile-padding path
    m_in = jax.random.normal(key, (*lead, M, M, C), dtype=jnp.float32)

    out = jax.block_until_ready(symbolic_messenger_forward(m_in))
    ref = jax.block_until_ready(ref_forward(m_in))

    assert out.shape == (*lead, M, M, 1)
    np.testing.assert_allclose(np.asarray(out), np.asarray(ref), rtol=1e-5, atol=1e-5)
    print("KERNEL_OK")
</pallas_src>

<mosaic_0001>
module attributes {stable_mosaic.version = 11 : i64} {
  func.func @kernel(%arg0: i32, %arg1: memref<8x128xf32, #tpu.memory_space<vmem>>, %arg2: memref<8x128xf32, #tpu.memory_space<vmem>>) attributes {dimension_semantics = [#tpu.dimension_semantics<parallel>], iteration_bounds = array<i64: 1>, scalar_prefetch = 0 : i64, scratch_operands = 0 : i64, tpu.core_type = #tpu.core_type<tc>, window_params = [{transform_indices = @transform_0, window_bounds = array<i64: 8, 128>}, {transform_indices = @transform_1, window_bounds = array<i64: 8, 128>}]} {
    %c0 = arith.constant 0 : index
    %c0_0 = arith.constant 0 : index
    %0 = vector.load %arg1[%c0, %c0_0] : memref<8x128xf32, #tpu.memory_space<vmem>>, vector<8x128xf32>
    %1 = tpu.concatenate %0, %0 in 1 : vector<8x128xf32>, vector<8x128xf32> -> vector<8x256xf32>
    %2 = tpu.iota {dimensions = array<i32: 1>} : vector<8x128xi32>
    %c16_i32 = arith.constant 16 : i32
    %c0_i32 = arith.constant 0 : i32
    %3 = arith.cmpi eq, %c16_i32, %c0_i32 : i32
    %c1_i32 = arith.constant 1 : i32
    %4 = arith.select %3, %c1_i32, %c16_i32 : i32
    %5 = vector.broadcast %4 : i32 to vector<8x128xi32>
    %6 = arith.remsi %2, %5 : vector<8x128xi32>
    %c0_i32_1 = arith.constant 0 : i32
    %7 = vector.broadcast %c0_i32_1 : i32 to vector<8x128xi32>
    %8 = arith.cmpi ne, %6, %7 : vector<8x128xi32>
    %c0_i32_2 = arith.constant 0 : i32
    %9 = vector.broadcast %c0_i32_2 : i32 to vector<8x128xi32>
    %10 = arith.cmpi slt, %6, %9 : vector<8x128xi32>
    %c0_i32_3 = arith.constant 0 : i32
    %11 = arith.cmpi slt, %4, %c0_i32_3 : i32
    %12 = vector.broadcast %11 : i1 to vector<8x128xi1>
    %13 = vector.broadcast %12 : vector<8x128xi1> to vector<8x128xi1>
    %14 = arith.xori %10, %13 : vector<8x128xi1>
    %15 = arith.andi %14, %8 : vector<8x128xi1>
    %16 = vector.broadcast %4 : i32 to vector<8x128xi32>
    %17 = arith.addi %6, %16 : vector<8x128xi32>
    %18 = arith.select %15, %17, %6 : vector<8x128xi1>, vector<8x128xi32>
    %cst = arith.constant 0.000000e+00 : f32
    %19 = vector.broadcast %cst : f32 to vector<8x128xf32>
    %20 = vector.extract_strided_slice %1 {offsets = [0, 1], sizes = [8, 128], strides = [1, 1]} : vector<8x256xf32> to vector<8x128xf32>
    %21 = arith.mulf %0, %20 : vector<8x128xf32>
    %c0_i32_4 = arith.constant 0 : i32
    %22 = vector.broadcast %c0_i32_4 : i32 to vector<8x128xi32>
    %23 = arith.cmpi eq, %18, %22 : vector<8x128xi32>
    %24 = arith.select %23, %21, %19 : vector<8x128xi1>, vector<8x128xf32>
    %25 = vector.extract_strided_slice %1 {offsets = [0, 127], sizes = [8, 128], strides = [1, 1]} : vector<8x256xf32> to vector<8x128xf32>
    %cst_5 = arith.constant 5.000000e-01 : f32
    %26 = vector.broadcast %cst_5 : f32 to vector<8x128xf32>
    %27 = arith.mulf %26, %0 : vector<8x128xf32>
    %28 = arith.addf %25, %27 : vector<8x128xf32>
    %c5_i32 = arith.constant 5 : i32
    %29 = vector.broadcast %c5_i32 : i32 to vector<8x128xi32>
    %30 = arith.cmpi eq, %18, %29 : vector<8x128xi32>
    %31 = arith.select %30, %28, %24 : vector<8x128xi1>, vector<8x128xf32>
    %32 = vector.extract_strided_slice %1 {offsets = [0, 126], sizes = [8, 128], strides = [1, 1]} : vector<8x256xf32> to vector<8x128xf32>
    %33 = vector.extract_strided_slice %1 {offsets = [0, 127], sizes = [8, 128], strides = [1, 1]} : vector<8x256xf32> to vector<8x128xf32>
    %34 = arith.mulf %33, %33 : vector<8x128xf32>
    %35 = arith.subf %32, %34 : vector<8x128xf32>
    %c10_i32 = arith.constant 10 : i32
    %36 = vector.broadcast %c10_i32 : i32 to vector<8x128xi32>
    %37 = arith.cmpi eq, %18, %36 : vector<8x128xi32>
    %38 = arith.select %37, %35, %31 : vector<8x128xi1>, vector<8x128xf32>
    %39 = vector.extract_strided_slice %1 {offsets = [0, 125], sizes = [8, 128], strides = [1, 1]} : vector<8x256xf32> to vector<8x128xf32>
    %40 = vector.extract_strided_slice %1 {offsets = [0, 126], sizes = [8, 128], strides = [1, 1]} : vector<8x256xf32> to vector<8x128xf32>
    %41 = arith.maximumf %39, %40 : vector<8x128xf32>
    %cst_6 = arith.constant 0.699999988 : f32
    %42 = vector.broadcast %cst_6 : f32 to vector<8x128xf32>
    %43 = arith.mulf %42, %41 : vector<8x128xf32>
    %c15_i32 = arith.constant 15 : i32
    %44 = vector.broadcast %c15_i32 : i32 to vector<8x128xi32>
    %45 = arith.cmpi eq, %18, %44 : vector<8x128xi32>
    %46 = arith.select %45, %43, %38 : vector<8x128xi1>, vector<8x128xf32>
    %c0_7 = arith.constant 0 : index
    %c0_8 = arith.constant 0 : index
    %47 = vector.load %arg2[%c0_7, %c0_8] : memref<8x128xf32, #tpu.memory_space<vmem>>, vector<8x128xf32>
    tpu.vector_store %arg2[%c0_7, %c0_8], %46 {strides = array<i32>} : memref<8x128xf32, #tpu.memory_space<vmem>>, vector<8x128xf32>,
    return
  }
  func.func @transform_0(%arg0: i32) -> (i32, i32) {
    %c0_i32 = arith.constant 0 : i32
    %c0_i32_0 = arith.constant 0 : i32
    return %arg0, %c0_i32 : i32, i32
  }
  func.func @transform_1(%arg0: i32) -> (i32, i32) {
    %c0_i32 = arith.constant 0 : i32
    %c0_i32_0 = arith.constant 0 : i32
    return %arg0, %c0_i32 : i32, i32
  }
}

</mosaic_0001>

<llo_original>
// kernel: symbolic_messenger_forward.1
$region0: #{symbolic_messenger_forward.1}
  #allocation0 [shape = 'u32[]', space=smem, size = 0x4, offset = 0x4, fixed_abs, tag = 'smem constant byte address 0x4 - core index']
  #allocation1 [shape = 'u32[144,128]{1,0:T(1,128)}', space=vmem, size = 0x12000, scoped, tag = 'internal scratch']
  %s0 = inlined_call_operand.vmem [shape: f32[8,128], index: 0, kind: input, shape index: {}]
  %s1 = inlined_call_operand.vmem [shape: f32[8,128], index: 1, kind: output, shape index: {}]
  %s2 = sld [smem:[#allocation0]]
  $region14: #{symbolic_messenger_forward.1} parent=0
    _
  %s4 = ssub.s32 1, %s2
  %s5 = scalar_select 0, %s4, %s2
  // Predicated region
  $region2: #{symbolic_messenger_forward.1} parent=0 // pred_check
    _
  $region3: #{symbolic_messenger_forward.1} parent=0 // pred_check_branch
    %7 = sbr.rel (0) target = $region5
  $region4: #{symbolic_messenger_forward.1} parent=0 // pred_region
    _
  $region5: #{symbolic_messenger_forward.1} parent=0 // pred_fallthru
    _
  %v8 = vld [vmem:[%s0] sm:$0xff]
  %v9 = vlaneseq
  %v10 = vand.u32 %v9, 127
  %vm11 = vcmp.lt.s32.totalorder %v10, 0
  %v12 = vsub.s32 0, %v10
  %v13 = vsel %vm11, %v12, %v10
  %v14 = vshrl.u32 %v13, 4
  %v15 = vand.u32 %v13, 15
  %v16 = vsub.s32 0, %v15
  %v17 = vsel %vm11, %v16, %v15
  %vm18 = vcmp.ne.s32.totalorder %v17, 0
  %vm19 = vcmp.lt.s32.totalorder %v17, 0
  %vm20 = vmand %vm19, %vm18
  %v21 = vadd.s32 %v17, 16
  %v22 = vsel %vm20, %v21, %v17
  %24 = vrot.lane.b32.xlu0 %v8, 127
  %v25 = vpop.permute.xlu0 %24
  %v27 = vmul.f32 %v8, %v25
  %vm28 = vcmp.eq.s32.totalorder %v22, 0
  %v29 = vsel %vm28, %v27, 0.0
  %v30 = vmul.f32 %v8, 0.5
  %32 = vrot.lane.b32.xlu0 %v30, 127
  %v33 = vpop.permute.xlu0 %32
  %v35 = vadd.f32 %v8, %v33
  %vm36 = vcmp.eq.s32.totalorder %v22, 5
  %38 = vrot.lane.b32.xlu0 %v35, 1
  %v39 = vpop.permute.xlu0 %38
  %v41 = vsel %vm36, %v39, %v29
  %v42 = vmul.f32 %v8, %v8
  %44 = vrot.lane.b32.xlu0 %v42, 127
  %v45 = vpop.permute.xlu0 %44
  %v47 = vsub.f32 %v8, %v45
  %vm48 = vcmp.eq.s32.totalorder %v22, 10
  %50 = vrot.lane.b32.xlu0 %v47, 2
  %v51 = vpop.permute.xlu0 %50
  %vm52 = vcmask 15360
  %v53 = vsel %vm52, %v51, %v51
  %v55 = vsel %vm48, %v53, %v41
  %v56 = vmax.f32 %v8, %v25
  %v57 = vmul.f32 %v56, 0.7
  %vm58 = vcmp.eq.s32.totalorder %v22, 15
  %60 = vrot.lane.b32.xlu0 %v57, 3
  %v61 = vpop.permute.xlu0 %60
  %vm62 = vcmask 23552
  %v63 = vsel %vm62, %v61, %v61
  %v65 = vsel %vm58, %v63, %v55
  %66 = vst [vmem:[%s1] sm:$0xff] %v65
  // Predicated region
  $region6: #{symbolic_messenger_forward.1} parent=0 // pred_check
    _
  $region7: #{symbolic_messenger_forward.1} parent=0 // pred_check_branch
    %68 = sbr.rel (0) target = $region9
  $region8: #{symbolic_messenger_forward.1} parent=0 // pred_region
    _
  $region9: #{symbolic_messenger_forward.1} parent=0 // pred_fallthru
    _
  // Predicated region
  $region10: #{symbolic_messenger_forward.1} parent=0 // pred_check
    _
  $region11: #{symbolic_messenger_forward.1} parent=0 // pred_check_branch
    %70 = sbr.rel (0) target = $region13
  $region12: #{symbolic_messenger_forward.1} parent=0 // pred_region
    _
  $region13: #{symbolic_messenger_forward.1} parent=0 // pred_fallthru
    _

</llo_original>
